<compile_context>
chip_gen: v7x
topology: tpu7x:2x2x1
jax: 0.10.0
libtpu: 0.0.40
codegen_flags: <defaults>
</compile_context>

<pallas_src>
import jax
import jax.numpy as jnp
from jax.experimental import pallas as pl
from jax.experimental.pallas import tpu as pltpu


def learnable_histogram_kernel(vec_ref, center_ref, width_ref, o_ref):
    v = vec_ref[...]                         # (1, TN)      f32
    c = center_ref[...]                      # (bin_num, 1) f32 (VMEM-resident)
    w = jnp.abs(width_ref[...])              # (bin_num, 1), hoisted: once/tile
    score = 1.0 - jnp.abs(v - c) * w         # broadcast -> (bin_num, TN), VPU only
    o_ref[...] = jnp.maximum(score, 0.0).astype(o_ref.dtype)


def _round_up(x, m):
    return ((x + m - 1) // m) * m


def learnable_histogram_forward(
    vec,
    bin_center,
    bin_width,
    *,
    block_n=8192,
    out_dtype=None,
    vmem_budget_bytes=12 * 1024 * 1024,  # conservative: fits v5e 16 MiB scoped default
):
    """vec: (N,) float32; bin_center/bin_width: (bin_num, 1) float32.

    Returns (bin_num, N), matching PyTorch broadcasting for a 1-D `vec`.
    `out_dtype=jnp.bfloat16` halves the dominant HBM writeback if the
    consumer tolerates it (default keeps the input dtype / exact semantics).
    """
    vec = jnp.asarray(vec)
    if vec.ndim == 2 and vec.shape[0] == 1:
        vec = vec[0]
    assert vec.ndim == 1, "wrapper implements the 1-D `vec` broadcasting case"
    # TODO(synk): other PyTorch-broadcastable `vec` shapes (e.g. (bin_num, K))
    # are not implemented; the module's real call sites use a flat vector.
    n = vec.shape[0]
    bin_num = bin_center.shape[0]
    out_dtype = vec.dtype if out_dtype is None else out_dtype
    out_bytes = jnp.dtype(out_dtype).itemsize

    # --- block_n selection -------------------------------------------------
    # VMEM cap: double-buffered output tile + double-buffered vec tile
    # (params are a few hundred bytes, ignore). Keeps the same code safe on
    # v5e (16 MiB scoped default), v6e (32/128 MiB) and v7x (64 MiB total).
    per_lane_bytes = 2 * (bin_num * out_bytes + 4)
    vmem_cap = max(128, (vmem_budget_bytes // per_lane_bytes) // 128 * 128)

    # Keep >= 2 grid steps when N allows it, so dimension_semantics="parallel"
    # can shard across the two TensorCores on v7x (neutral on v5e/v6e).
    half_cap = _round_up(pl.cdiv(n, 2), 128)

    block_n = min(block_n, vmem_cap, half_cap)
    block_n = max(128, _round_up(block_n, 128))     # lane-dense, (8,128)-legal
    block_n = min(block_n, _round_up(n, 128))       # don't exceed (rounded) N

    grid = (pl.cdiv(n, block_n),)
    vec2d = vec.reshape(1, n)

    cost = pl.CostEstimate(
        flops=5 * bin_num * n,
        transcendentals=0,
        bytes_accessed=4 * (n + 2 * bin_num) + out_bytes * bin_num * n,
    )

    return pl.pallas_call(
        learnable_histogram_kernel,
        out_shape=jax.ShapeDtypeStruct((bin_num, n), out_dtype),
        grid=grid,
        in_specs=[
            # vec tile marches along the lane axis; edge block is clipped by Pallas.
            pl.BlockSpec((1, block_n), lambda i: (0, i)),
            # parameters: constant block index -> stay resident in VMEM.
            pl.BlockSpec((bin_num, 1), lambda i: (0, 0)),
            pl.BlockSpec((bin_num, 1), lambda i: (0, 0)),
        ],
        # Note: keep bin_num a multiple of 8 (16 for bf16) for unmasked stores;
        # ragged bin counts still work (full-extent sublane block), just masked.
        out_specs=pl.BlockSpec((bin_num, block_n), lambda i: (0, i)),
        compiler_params=pltpu.CompilerParams(
            # N-tiles are independent -> shard across TCs on v7x; harmless on v5e/v6e.
            dimension_semantics=("parallel",),
        ),
        cost_estimate=cost,
    )(vec2d, bin_center, bin_width)


def learnable_histogram_reference(vec, bin_center, bin_width):
    score = vec[None, :] - bin_center            # (bin_num, N)
    score = 1.0 - jnp.abs(score) * jnp.abs(bin_width)
    return jnp.maximum(score, 0.0)


if __name__ == "__main__":
    BIN_NUM = 8
    # Deliberately NOT a multiple of 128 (nor of block_n) to exercise the
    # masked edge-block path that replaced the old pad+slice wrapper.
    N = 5000

    key = jax.random.PRNGKey(0)
    kv, kw, kc = jax.random.split(key, 3)

    vec = jax.random.normal(kv, (N,), dtype=jnp.float32)

    # Deterministic xavier_uniform-style init for the (bin_num, 1) parameters:
    # bound = sqrt(6 / (fan_in + fan_out)) with fan_in=1, fan_out=bin_num.
    bound = (6.0 / (1.0 + BIN_NUM)) ** 0.5
    bin_width = jax.random.uniform(kw, (BIN_NUM, 1), jnp.float32, -bound, bound)
    bin_center = jax.random.uniform(kc, (BIN_NUM, 1), jnp.float32, -bound, bound)

    out = learnable_histogram_forward(vec, bin_center, bin_width)
    out = jax.block_until_ready(out)

    ref = learnable_histogram_reference(vec, bin_center, bin_width)
    assert out.shape == (BIN_NUM, N)
    assert jnp.allclose(out, ref, atol=1e-6, rtol=1e-6)

    # Also check an aligned, multi-tile size to lock in grid >= 2 behavior.
    vec2 = jax.random.normal(kv, (16384,), dtype=jnp.float32)
    out2 = jax.block_until_ready(
        learnable_histogram_forward(vec2, bin_center, bin_width)
    )
    ref2 = learnable_histogram_reference(vec2, bin_center, bin_width)
    assert jnp.allclose(out2, ref2, atol=1e-6, rtol=1e-6)

    print("KERNEL_OK")
</pallas_src>

<mosaic_0001>
module attributes {stable_mosaic.version = 11 : i64} {
  func.func @learnable_histogram_kernel(%arg0: i32, %arg1: memref<1x2560xf32, #tpu.memory_space<vmem>>, %arg2: memref<8x1xf32, #tpu.memory_space<vmem>>, %arg3: memref<8x1xf32, #tpu.memory_space<vmem>>, %arg4: memref<8x2560xf32, #tpu.memory_space<vmem>>) attributes {dimension_semantics = [#tpu.dimension_semantics<parallel>], iteration_bounds = array<i64: 2>, scalar_prefetch = 0 : i64, scratch_operands = 0 : i64, tpu.core_type = #tpu.core_type<tc>, window_params = [{transform_indices = @transform_0, window_bounds = array<i64: 1, 2560>}, {pipeline_mode = #tpu.pipeline_mode<synchronous>, transform_indices = @transform_1, window_bounds = array<i64: 8, 1>}, {pipeline_mode = #tpu.pipeline_mode<synchronous>, transform_indices = @transform_2, window_bounds = array<i64: 8, 1>}, {transform_indices = @transform_3, window_bounds = array<i64: 8, 2560>}]} {
    %c0 = arith.constant 0 : index
    %c0_0 = arith.constant 0 : index
    %0 = vector.load %arg1[%c0, %c0_0] : memref<1x2560xf32, #tpu.memory_space<vmem>>, vector<1x2560xf32>
    %c0_1 = arith.constant 0 : index
    %c0_2 = arith.constant 0 : index
    %1 = vector.load %arg2[%c0_1, %c0_2] : memref<8x1xf32, #tpu.memory_space<vmem>>, vector<8x1xf32>
    %c0_3 = arith.constant 0 : index
    %c0_4 = arith.constant 0 : index
    %2 = vector.load %arg3[%c0_3, %c0_4] : memref<8x1xf32, #tpu.memory_space<vmem>>, vector<8x1xf32>
    %3 = math.absf %2 : vector<8x1xf32>
    %4 = vector.broadcast %0 : vector<1x2560xf32> to vector<8x2560xf32>
    %5 = vector.broadcast %1 : vector<8x1xf32> to vector<8x2560xf32>
    %6 = arith.subf %4, %5 : vector<8x2560xf32>
    %7 = math.absf %6 : vector<8x2560xf32>
    %8 = vector.broadcast %3 : vector<8x1xf32> to vector<8x2560xf32>
    %9 = arith.mulf %7, %8 : vector<8x2560xf32>
    %cst = arith.constant 1.000000e+00 : f32
    %10 = vector.broadcast %cst : f32 to vector<8x2560xf32>
    %11 = arith.subf %10, %9 : vector<8x2560xf32>
    %cst_5 = arith.constant 0.000000e+00 : f32
    %12 = vector.broadcast %cst_5 : f32 to vector<8x2560xf32>
    %13 = arith.maximumf %11, %12 : vector<8x2560xf32>
    %c0_6 = arith.constant 0 : index
    %c0_7 = arith.constant 0 : index
    %14 = vector.load %arg4[%c0_6, %c0_7] : memref<8x2560xf32, #tpu.memory_space<vmem>>, vector<8x2560xf32>
    tpu.vector_store %arg4[%c0_6, %c0_7], %13 {strides = array<i32>} : memref<8x2560xf32, #tpu.memory_space<vmem>>, vector<8x2560xf32>,
    return
  }
  func.func @transform_0(%arg0: i32) -> (i32, i32) {
    %c0_i32 = arith.constant 0 : i32
    %c0_i32_0 = arith.constant 0 : i32
    return %c0_i32, %arg0 : i32, i32
  }
  func.func @transform_1(%arg0: i32) -> (i32, i32) {
    %c0_i32 = arith.constant 0 : i32
    %c0_i32_0 = arith.constant 0 : i32
    %c0_i32_1 = arith.constant 0 : i32
    return %c0_i32, %c0_i32_0 : i32, i32
  }
  func.func @transform_2(%arg0: i32) -> (i32, i32) {
    %c0_i32 = arith.constant 0 : i32
    %c0_i32_0 = arith.constant 0 : i32
    %c0_i32_1 = arith.constant 0 : i32
    return %c0_i32, %c0_i32_0 : i32, i32
  }
  func.func @transform_3(%arg0: i32) -> (i32, i32) {
    %c0_i32 = arith.constant 0 : i32
    %c0_i32_0 = arith.constant 0 : i32
    return %c0_i32, %arg0 : i32, i32
  }
}

</mosaic_0001>

<llo_original>
// kernel: tpu_custom_call.1
$region0: #{tpu_custom_call.1}
  #allocation0 [shape = 'u32[]', space=smem, size = 0x4, offset = 0x4, fixed_abs, tag = 'smem constant byte address 0x4 - core index']
  #allocation1 [shape = 'u32[144,128]{1,0:T(1,128)}', space=vmem, size = 0x12000, scoped, tag = 'internal scratch']
  %s0 = inlined_call_operand.hbm [shape: f32[1,5000], index: 0, kind: input, shape index: {}]
  %s1 = inlined_call_operand.vmem [shape: f32[8,1], index: 1, kind: input, shape index: {}]
  %s2 = inlined_call_operand.vmem [shape: f32[8,1], index: 2, kind: input, shape index: {}]
  %s3 = inlined_call_operand.hbm [shape: f32[8,5000], index: 3, kind: output, shape index: {}]
  %s4 = sld [smem:[#allocation0]]
  $region49: #{tpu_custom_call.1} parent=0
    _
  %s6 = ssub.s32 1, %s4
  %s7 = scalar_select 0, %s6, %s4
  $region1: #{tpu_custom_call.1} parent=0
    #allocation2 [shape = 'u8[20480]{0}', space=vmem, size = 0x5000, scoped, tag = 'input window, operand 0']
    #allocation3 [shape = 's32[2]{0}', space=sflag, size = 0x8, scoped, tag = 'scoped memory for tpu_custom_call.1']
    #allocation4 [shape = 's32[2]{0}', space=sflag, size = 0x8, scoped, tag = 'scoped memory for tpu_custom_call.1']
    #allocation5 [shape = 'u8[163840]{0}', space=vmem, size = 0x28000, scoped, tag = 'output window, operand 0']
    %8 = vsyncpa [#allocation3], 0
    %s9 = scalar_lea.sflag [#allocation3], 1
    %10 = vsyncpa %s9, 0
    %11 = vsyncpa [#allocation4], 0
    %s12 = scalar_lea.sflag [#allocation4], 1
    %13 = vsyncpa %s12, 0
    loop: start=0, step=1, limit=4
    $region2: #{tpu_custom_call.1} parent=1 // loop_pre_header
      _
    $region3: #{tpu_custom_call.1} parent=1 // loop_header
      %s15 = sphi 0, %s19
      %p16 = scmp.ge.s32.totalorder %s15, 4
      %s25 = sphi 0, %s27
      %s28 = sphi 0, %s25
      %s29 = sphi 0, %s28
      %s45 = sphi 0, %s29
      %s49 = sphi 0, %s49
      %s51 = sphi 0, %s49
      %s52 = sphi 0, %s51
      %s66 = sphi 0, %s52
      %s70 = sphi 0, %s70
      %s72 = sphi 0, %s70
      %s73 = sphi 0, %s72
      %s87 = sphi 0, %s73
      %s93 = sphi 0, %s95
      %s96 = sphi 0, %s93
      %s97 = sphi 0, %s96
      %s113 = sphi 0, %s97
    $region4: #{tpu_custom_call.1} parent=1 // loop_header_branch
      %18 = sbr.rel (%p16) target = $region8
    $region5: #{tpu_custom_call.1} parent=1 // loop_body
      %s20 = ssub.s32 %s15, 1
      %s21 = ssub.s32 %s15, 2
      %s22 = sadd.s32 %s15, 1
      %s23 = ssub.s32 %s15, %s22
      %p24 = scmp.eq.s32.totalorder %s23, 0
      %s26 = sadd.s32 %s25, 1
      %s27 = scalar_select %p24, %s25, %s26
      %p30 = pneg %p24
      %p31 = scmp.eq.s32.totalorder %s15, 1
      %p32 = por %p30, %p31
      %p33 = scmp.ne.s32.totalorder %s25, %s28
      %p34 = scmp.eq.s32.totalorder %s15, 0
      %p35 = por %p33, %p34
      %p36 = scmp.ne.s32.totalorder %s25, %s28
      %p37 = scmp.eq.s32.totalorder %s20, 1
      %p38 = por %p36, %p37
      %p39 = scmp.ne.s32.totalorder %s28, %s29
      %p40 = scmp.eq.s32.totalorder %s20, 0
      %p41 = por %p39, %p40
      %p42 = scmp.ne.s32.totalorder %s28, %s29
      %p43 = scmp.eq.s32.totalorder %s21, 1
      %p44 = por %p42, %p43
      %p46 = scmp.ne.s32.totalorder %s29, %s45
      %p47 = scmp.eq.s32.totalorder %s21, 0
      %p48 = por %p46, %p47
      %s50 = sadd.s32 %s49, 1
      %p53 = scmp.eq.s32.totalorder %s15, 1
      %p54 = scmp.ne.s32.totalorder %s49, %s51
      %p55 = scmp.eq.s32.totalorder %s15, 0
      %p56 = por %p54, %p55
      %p57 = scmp.ne.s32.totalorder %s49, %s51
      %p58 = scmp.eq.s32.totalorder %s20, 1
      %p59 = por %p57, %p58
      %p60 = scmp.ne.s32.totalorder %s51, %s52
      %p61 = scmp.eq.s32.totalorder %s20, 0
      %p62 = por %p60, %p61
      %p63 = scmp.ne.s32.totalorder %s51, %s52
      %p64 = scmp.eq.s32.totalorder %s21, 1
      %p65 = por %p63, %p64
      %p67 = scmp.ne.s32.totalorder %s52, %s66
      %p68 = scmp.eq.s32.totalorder %s21, 0
      %p69 = por %p67, %p68
      %s71 = sadd.s32 %s70, 1
      %p74 = scmp.eq.s32.totalorder %s15, 1
      %p75 = scmp.ne.s32.totalorder %s70, %s72
      %p76 = scmp.eq.s32.totalorder %s15, 0
      %p77 = por %p75, %p76
      %p78 = scmp.ne.s32.totalorder %s70, %s72
      %p79 = scmp.eq.s32.totalorder %s20, 1
      %p80 = por %p78, %p79
      %p81 = scmp.ne.s32.totalorder %s72, %s73
      %p82 = scmp.eq.s32.totalorder %s20, 0
      %p83 = por %p81, %p82
      %p84 = scmp.ne.s32.totalorder %s72, %s73
      %p85 = scmp.eq.s32.totalorder %s21, 1
      %p86 = por %p84, %p85
      %p88 = scmp.ne.s32.totalorder %s73, %s87
      %p89 = scmp.eq.s32.totalorder %s21, 0
      %p90 = por %p88, %p89
      %s91 = ssub.s32 %s15, %s22
      %p92 = scmp.eq.s32.totalorder %s91, 0
      %s94 = sadd.s32 %s93, 1
      %s95 = scalar_select %p92, %s93, %s94
      %p98 = pneg %p92
      %p99 = scmp.eq.s32.totalorder %s15, 1
      %p100 = por %p98, %p99
      %p101 = scmp.ne.s32.totalorder %s93, %s96
      %p102 = scmp.eq.s32.totalorder %s15, 0
      %p103 = por %p101, %p102
      %p104 = scmp.ne.s32.totalorder %s93, %s96
      %p105 = scmp.eq.s32.totalorder %s20, 1
      %p106 = por %p104, %p105
      %p107 = scmp.ne.s32.totalorder %s96, %s97
      %p108 = scmp.eq.s32.totalorder %s20, 0
      %p109 = por %p107, %p108
      %p110 = scmp.ne.s32.totalorder %s96, %s97
      %p111 = scmp.eq.s32.totalorder %s21, 1
      %p112 = por %p110, %p111
      %p114 = scmp.ne.s32.totalorder %s97, %s113
      %p115 = scmp.eq.s32.totalorder %s21, 0
      %p116 = por %p114, %p115
      %p117 = scmp.le.s32.totalorder 1, %s15
      %p118 = scmp.lt.s32.totalorder %s15, 3
      %p119 = pnand %p117, %p118
      %p120 = pneg %p119
      // Predicated region
      $region9: #{tpu_custom_call.1} parent=5 // pred_check
        _
      $region10: #{tpu_custom_call.1} parent=5 // pred_check_branch
        %122 = sbr.rel (%p119) target = $region12
      $region11: #{tpu_custom_call.1} parent=5 // pred_region
        %s123 = ssub.s32 %s15, 1
        // Predicated region
        $region13: #{tpu_custom_call.1} parent=11 // pred_check
          %p124 = pneg %p62
        $region14: #{tpu_custom_call.1} parent=11 // pred_check_branch
          %126 = sbr.rel (%p124) target = $region16
        $region15: #{tpu_custom_call.1} parent=11 // pred_region
          _
        $region16: #{tpu_custom_call.1} parent=11 // pred_fallthru
          _
        // Predicated region
        $region17: #{tpu_custom_call.1} parent=11 // pred_check
          %p127 = pneg %p83
        $region18: #{tpu_custom_call.1} parent=11 // pred_check_branch
          %129 = sbr.rel (%p127) target = $region20
        $region19: #{tpu_custom_call.1} parent=11 // pred_region
          _
        $region20: #{tpu_custom_call.1} parent=11 // pred_fallthru
          _
      $region12: #{tpu_custom_call.1} parent=5 // pred_fallthru
        _
      %p130 = scmp.lt.s32.totalorder %s15, 2
      // Predicated region
      $region21: #{tpu_custom_call.1} parent=5 // pred_check
        %p131 = pneg %p130
      $region22: #{tpu_custom_call.1} parent=5 // pred_check_branch
        %133 = sbr.rel (%p131) target = $region24
      $region23: #{tpu_custom_call.1} parent=5 // pred_region
        // Predicated region
        $region25: #{tpu_custom_call.1} parent=23 // pred_check
          %p134 = pneg %p35
        $region26: #{tpu_custom_call.1} parent=23 // pred_check_branch
          %136 = sbr.rel (%p134) target = $region28
        $region27: #{tpu_custom_call.1} parent=23 // pred_region
          %s137 = sand.u32 %s25, 1
          %s138 = scalar_lea.sflag [#allocation3], %s137
          %s139 = sand.u32 %s25, 1
          %s140 = smul.addr %s139, 20
          %s141 = scalar_lea.vmem [#allocation2], %s140
          %s142 = smul.u32 20, %s15
          %s144 = ssub.s32 320, 320
          %145 = vsyncadd %s138, %s144
          %s146 = smul.addr %s142, 16
          %s147 = scalar_lea.hbm %s0, %s146
          %s149 = sshll.u32 %s141, 4
          %s150 = int_to_ptr.vmem [resolvable:$true] %s149
          %152 = dma.hbm_to_vmem [thread:$0]  %s147, 320, %s150, %s138
        $region28: #{tpu_custom_call.1} parent=23 // pred_fallthru
          _
      $region24: #{tpu_custom_call.1} parent=5 // pred_fallthru
        _
      %p153 = scmp.le.s32.totalorder 1, %s15
      %p154 = scmp.lt.s32.totalorder %s15, 3
      %p155 = pnand %p153, %p154
      %p156 = pneg %p155
      // Predicated region
      $region29: #{tpu_custom_call.1} parent=5 // pred_check
        _
      $region30: #{tpu_custom_call.1} parent=5 // pred_check_branch
        %158 = sbr.rel (%p155) target = $region32
      $region31: #{tpu_custom_call.1} parent=5 // pred_region
        %s159 = ssub.s32 %s15, 1
        %s160 = sand.u32 %s28, 1
        %s161 = scalar_lea.sflag [#allocation3], %s160
        %s162 = sand.u32 %s28, 1
        %s163 = smul.addr %s162, 20
        %s164 = scalar_lea.vmem [#allocation2], %s163
        // Predicated region
        $region33: #{tpu_custom_call.1} parent=31 // pred_check
          %p165 = pneg %p41
        $region34: #{tpu_custom_call.1} parent=31 // pred_check_branch
          %167 = sbr.rel (%p165) target = $region36
        $region35: #{tpu_custom_call.1} parent=31 // pred_region
          %168 = dma.done %s161, 320
        $region36: #{tpu_custom_call.1} parent=31 // pred_fallthru
          _
        %s169 = sand.u32 %s28, 1
        %s170 = scalar_lea.sflag [#allocation3], %s169
        %s171 = sand.u32 %s28, 1
        %s172 = smul.addr %s171, 20
        %s173 = scalar_lea.vmem [#allocation2], %s172
        %p174 = pneg %p41
        %p175 = pneg %p38
        %p176 = pneg %p62
        %p177 = pneg %p59
        %p178 = pneg %p83
        %p179 = pneg %p80
        %p180 = pneg %p109
        %p181 = pneg %p106
        %s182 = sand.u32 %s96, 1
        %s183 = scalar_lea.sflag [#allocation4], %s182
        %s184 = sand.u32 %s96, 1
        %s185 = smul.addr %s184, 160
        %s186 = scalar_lea.vmem [#allocation5], %s185
        %s187 = smul.u32 20, %s20
        %s188 = smul.u32 20, %s20
        %v189 = vld [vmem:[%s164] sm:$0xff]
        %v190 = vld [vmem:[%s164 + $0x8] sm:$0xff]
        %v191 = vld [vmem:[%s164 + $0x10] sm:$0xf]
        %v192 = vld [vmem:[%s1] sm:$0xff]
        %v193 = vld [vmem:[%s2] sm:$0xff]
        %v194 = vand.u32 2147483647, %v193
        %v198 = vlaneseq
        %v199 = vshrl.u32 %v198, 7
        %v200 = vsub.s32 0, %v199
        %v201 = vrot.slane %v189, %v200
        %v202 = vlaneseq
        %v203 = vshrl.u32 %v202, 7
        %v204 = vsub.s32 1, %v203
        %v205 = vrot.slane %v189, %v204
        %v206 = vlaneseq
        %v207 = vshrl.u32 %v206, 7
        %v208 = vsub.s32 2, %v207
        %v209 = vrot.slane %v189, %v208
        %v210 = vlaneseq
        %v211 = vshrl.u32 %v210, 7
        %v212 = vsub.s32 3, %v211
        %v213 = vrot.slane %v189, %v212
        %v214 = vlaneseq
        %v215 = vshrl.u32 %v214, 7
        %v216 = vsub.s32 4, %v215
        %v217 = vrot.slane %v189, %v216
        %v218 = vlaneseq
        %v219 = vshrl.u32 %v218, 7
        %v220 = vsub.s32 5, %v219
        %v221 = vrot.slane %v189, %v220
        %v222 = vlaneseq
        %v223 = vshrl.u32 %v222, 7
        %v224 = vsub.s32 6, %v223
        %v225 = vrot.slane %v189, %v224
        %v226 = vlaneseq
        %v227 = vshrl.u32 %v226, 7
        %v228 = vsub.s32 7, %v227
        %v229 = vrot.slane %v189, %v228
        %v230 = vlaneseq
        %v231 = vshrl.u32 %v230, 7
        %v232 = vsub.s32 0, %v231
        %v233 = vrot.slane %v190, %v232
        %v234 = vlaneseq
        %v235 = vshrl.u32 %v234, 7
        %v236 = vsub.s32 1, %v235
        %v237 = vrot.slane %v190, %v236
        %v238 = vlaneseq
        %v239 = vshrl.u32 %v238, 7
        %v240 = vsub.s32 2, %v239
        %v241 = vrot.slane %v190, %v240
        %v242 = vlaneseq
        %v243 = vshrl.u32 %v242, 7
        %v244 = vsub.s32 3, %v243
        %v245 = vrot.slane %v190, %v244
        %v246 = vlaneseq
        %v247 = vshrl.u32 %v246, 7
        %v248 = vsub.s32 4, %v247
        %v249 = vrot.slane %v190, %v248
        %v250 = vlaneseq
        %v251 = vshrl.u32 %v250, 7
        %v252 = vsub.s32 5, %v251
        %v253 = vrot.slane %v190, %v252
        %v254 = vlaneseq
        %v255 = vshrl.u32 %v254, 7
        %v256 = vsub.s32 6, %v255
        %v257 = vrot.slane %v190, %v256
        %v258 = vlaneseq
        %v259 = vshrl.u32 %v258, 7
        %v260 = vsub.s32 7, %v259
        %v261 = vrot.slane %v190, %v260
        %v262 = vlaneseq
        %v263 = vshrl.u32 %v262, 7
        %v264 = vsub.s32 0, %v263
        %v265 = vrot.slane %v191, %v264
        %v266 = vlaneseq
        %v267 = vshrl.u32 %v266, 7
        %v268 = vsub.s32 1, %v267
        %v269 = vrot.slane %v191, %v268
        %v270 = vlaneseq
        %v271 = vshrl.u32 %v270, 7
        %v272 = vsub.s32 2, %v271
        %v273 = vrot.slane %v191, %v272
        %v274 = vlaneseq
        %v275 = vshrl.u32 %v274, 7
        %v276 = vsub.s32 3, %v275
        %v277 = vrot.slane %v191, %v276
        %299 = vset.pattern.permute.xlu0 0
        %300 = vperm.xlu0 %299, %v192
        %v301 = vpop.permute.xlu0 %300
        %v303 = vsub.f32 %v201, %v301
        %v304 = vsub.f32 %v205, %v301
        %v305 = vsub.f32 %v209, %v301
        %v306 = vsub.f32 %v213, %v301
        %v307 = vsub.f32 %v217, %v301
        %v308 = vsub.f32 %v221, %v301
        %v309 = vsub.f32 %v225, %v301
        %v310 = vsub.f32 %v229, %v301
        %v311 = vsub.f32 %v233, %v301
        %v312 = vsub.f32 %v237, %v301
        %v313 = vsub.f32 %v241, %v301
        %v314 = vsub.f32 %v245, %v301
        %v315 = vsub.f32 %v249, %v301
        %v316 = vsub.f32 %v253, %v301
        %v317 = vsub.f32 %v257, %v301
        %v318 = vsub.f32 %v261, %v301
        %v319 = vsub.f32 %v265, %v301
        %v320 = vsub.f32 %v269, %v301
        %v321 = vsub.f32 %v273, %v301
        %v322 = vsub.f32 %v277, %v301
        %v323 = vand.u32 2147483647, %v303
        %v324 = vand.u32 2147483647, %v304
        %v325 = vand.u32 2147483647, %v305
        %v326 = vand.u32 2147483647, %v306
        %v327 = vand.u32 2147483647, %v307
        %v328 = vand.u32 2147483647, %v308
        %v329 = vand.u32 2147483647, %v309
        %v330 = vand.u32 2147483647, %v310
        %v331 = vand.u32 2147483647, %v311
        %v332 = vand.u32 2147483647, %v312
        %v333 = vand.u32 2147483647, %v313
        %v334 = vand.u32 2147483647, %v314
        %v335 = vand.u32 2147483647, %v315
        %v336 = vand.u32 2147483647, %v316
        %v337 = vand.u32 2147483647, %v317
        %v338 = vand.u32 2147483647, %v318
        %v339 = vand.u32 2147483647, %v319
        %v340 = vand.u32 2147483647, %v320
        %v341 = vand.u32 2147483647, %v321
        %v342 = vand.u32 2147483647, %v322
        %344 = vset.pattern.permute.xlu0 0
        %345 = vperm.xlu0 %344, %v194
        %v346 = vpop.permute.xlu0 %345
        %v348 = vmul.f32 %v323, %v346
        %v349 = vmul.f32 %v324, %v346
        %v350 = vmul.f32 %v325, %v346
        %v351 = vmul.f32 %v326, %v346
        %v352 = vmul.f32 %v327, %v346
        %v353 = vmul.f32 %v328, %v346
        %v354 = vmul.f32 %v329, %v346
        %v355 = vmul.f32 %v330, %v346
        %v356 = vmul.f32 %v331, %v346
        %v357 = vmul.f32 %v332, %v346
        %v358 = vmul.f32 %v333, %v346
        %v359 = vmul.f32 %v334, %v346
        %v360 = vmul.f32 %v335, %v346
        %v361 = vmul.f32 %v336, %v346
        %v362 = vmul.f32 %v337, %v346
        %v363 = vmul.f32 %v338, %v346
        %v364 = vmul.f32 %v339, %v346
        %v365 = vmul.f32 %v340, %v346
        %v366 = vmul.f32 %v341, %v346
        %v367 = vmul.f32 %v342, %v346
        %v368 = vsub.f32 1.0, %v348
        %v369 = vsub.f32 1.0, %v349
        %v370 = vsub.f32 1.0, %v350
        %v371 = vsub.f32 1.0, %v351
        %v372 = vsub.f32 1.0, %v352
        %v373 = vsub.f32 1.0, %v353
        %v374 = vsub.f32 1.0, %v354
        %v375 = vsub.f32 1.0, %v355
        %v376 = vsub.f32 1.0, %v356
        %v377 = vsub.f32 1.0, %v357
        %v378 = vsub.f32 1.0, %v358
        %v379 = vsub.f32 1.0, %v359
        %v380 = vsub.f32 1.0, %v360
        %v381 = vsub.f32 1.0, %v361
        %v382 = vsub.f32 1.0, %v362
        %v383 = vsub.f32 1.0, %v363
        %v384 = vsub.f32 1.0, %v364
        %v385 = vsub.f32 1.0, %v365
        %v386 = vsub.f32 1.0, %v366
        %v387 = vsub.f32 1.0, %v367
        %v388 = vmax.f32 %v368, 0.0
        %v389 = vmax.f32 %v369, 0.0
        %v390 = vmax.f32 %v370, 0.0
        %v391 = vmax.f32 %v371, 0.0
        %v392 = vmax.f32 %v372, 0.0
        %v393 = vmax.f32 %v373, 0.0
        %v394 = vmax.f32 %v374, 0.0
        %v395 = vmax.f32 %v375, 0.0
        %v396 = vmax.f32 %v376, 0.0
        %v397 = vmax.f32 %v377, 0.0
        %v398 = vmax.f32 %v378, 0.0
        %v399 = vmax.f32 %v379, 0.0
        %v400 = vmax.f32 %v380, 0.0
        %v401 = vmax.f32 %v381, 0.0
        %v402 = vmax.f32 %v382, 0.0
        %v403 = vmax.f32 %v383, 0.0
        %v404 = vmax.f32 %v384, 0.0
        %v405 = vmax.f32 %v385, 0.0
        %v406 = vmax.f32 %v386, 0.0
        %v407 = vmax.f32 %v387, 0.0
        %408 = vst [vmem:[%s186] sm:$0xff] %v388
        %409 = vst [vmem:[%s186 + $0x8] sm:$0xff] %v389
        %410 = vst [vmem:[%s186 + $0x10] sm:$0xff] %v390
        %411 = vst [vmem:[%s186 + $0x18] sm:$0xff] %v391
        %412 = vst [vmem:[%s186 + $0x20] sm:$0xff] %v392
        %413 = vst [vmem:[%s186 + $0x28] sm:$0xff] %v393
        %414 = vst [vmem:[%s186 + $0x30] sm:$0xff] %v394
        %415 = vst [vmem:[%s186 + $0x38] sm:$0xff] %v395
        %416 = vst [vmem:[%s186 + $0x40] sm:$0xff] %v396
        %417 = vst [vmem:[%s186 + $0x48] sm:$0xff] %v397
        %418 = vst [vmem:[%s186 + $0x50] sm:$0xff] %v398
        %419 = vst [vmem:[%s186 + $0x58] sm:$0xff] %v399
        %420 = vst [vmem:[%s186 + $0x60] sm:$0xff] %v400
        %421 = vst [vmem:[%s186 + $0x68] sm:$0xff] %v401
        %422 = vst [vmem:[%s186 + $0x70] sm:$0xff] %v402
        %423 = vst [vmem:[%s186 + $0x78] sm:$0xff] %v403
        %424 = vst [vmem:[%s186 + $0x80] sm:$0xff] %v404
        %425 = vst [vmem:[%s186 + $0x88] sm:$0xff] %v405
        %426 = vst [vmem:[%s186 + $0x90] sm:$0xff] %v406
        %427 = vst [vmem:[%s186 + $0x98] sm:$0xff] %v407
        %s428 = sand.u32 %s96, 1
        %s429 = scalar_lea.sflag [#allocation4], %s428
        %s430 = sand.u32 %s96, 1
        %s431 = smul.addr %s430, 160
        %s432 = scalar_lea.vmem [#allocation5], %s431
        // Predicated region
        $region37: #{tpu_custom_call.1} parent=31 // pred_check
          %p433 = pneg %p106
        $region38: #{tpu_custom_call.1} parent=31 // pred_check_branch
          %435 = sbr.rel (%p433) target = $region40
        $region39: #{tpu_custom_call.1} parent=31 // pred_region
          %s436 = smul.u32 20, %s20
          %s438 = ssub.s32 2560, 2560
          %439 = vsyncadd %s429, %s438
          %s440 = smul.addr %s436, 128
          %s441 = scalar_lea.hbm %s3, %s440
          %s443 = sshll.u32 %s432, 4
          %s444 = int_to_ptr.vmem [resolvable:$true] %s443
          %446 = dma.vmem_to_hbm [thread:$0]  %s444, 2560, %s441, %s429
        $region40: #{tpu_custom_call.1} parent=31 // pred_fallthru
          _
      $region32: #{tpu_custom_call.1} parent=5 // pred_fallthru
        _
      %p447 = scmp.le.s32.totalorder 2, %s15
      // Predicated region
      $region41: #{tpu_custom_call.1} parent=5 // pred_check
        %p448 = pneg %p447
      $region42: #{tpu_custom_call.1} parent=5 // pred_check_branch
        %450 = sbr.rel (%p448) target = $region44
      $region43: #{tpu_custom_call.1} parent=5 // pred_region
        %s451 = ssub.s32 %s15, 2
        // Predicated region
        $region45: #{tpu_custom_call.1} parent=43 // pred_check
          %p452 = pneg %p112
        $region46: #{tpu_custom_call.1} parent=43 // pred_check_branch
          %454 = sbr.rel (%p452) target = $region48
        $region47: #{tpu_custom_call.1} parent=43 // pred_region
          %s455 = sand.u32 %s97, 1
          %s456 = scalar_lea.sflag [#allocation4], %s455
          %s457 = sand.u32 %s97, 1
          %s458 = smul.addr %s457, 160
          %s459 = scalar_lea.vmem [#allocation5], %s458
          %460 = dma.done %s456, 2560
        $region48: #{tpu_custom_call.1} parent=43 // pred_fallthru
          _
      $region44: #{tpu_custom_call.1} parent=5 // pred_fallthru
        _
    $region6: #{tpu_custom_call.1} parent=1 // loop_footer
      %s19 = sadd.s32 1, %s15
    $region7: #{tpu_custom_call.1} parent=1 // loop_footer_branch
      %14 = sbr.rel target = $region3
    $region8: #{tpu_custom_call.1} parent=1 // loop_exit
      _
    %461 = vsyncpa [#allocation3], 1
    %s462 = scalar_lea.sflag [#allocation3], 1
    %463 = vsyncpa %s462, 1
    %464 = vsyncpa [#allocation4], 1
    %s465 = scalar_lea.sflag [#allocation4], 1
    %466 = vsyncpa %s465, 1

</llo_original>
